<compile_context>
chip_gen: v7x
topology: tpu7x:2x2x1
jax: 0.10.0
libtpu: 0.0.40
codegen_flags: <defaults>
</compile_context>

<pallas_src>
import jax
import jax.numpy as jnp
from jax.experimental import pallas as pl
from jax.experimental.pallas import tpu as pltpu
import numpy as np

BN_EPS = 1e-5
NEG_SLOPE = 0.2
LANES = 128
NEG_BIG = -1e30  # additive mask value for padded logit lanes

# -------- packed parameter slab row layout (all rows are 128 lanes wide) --------
_ROW_G1, _ROW_BE1, _ROW_B1 = 0, 1, 2          # BN1 gamma/beta, fc1 bias
_ROW_G2, _ROW_BE2, _ROW_B2 = 3, 4, 5          # BN2 gamma/beta, fc2 bias
_ROW_BO, _ROW_MASK = 6, 7                     # fc_outp bias, softmax additive mask
_ROW_W1 = 8                                   # W1: rows  8..135  (128x128, real (32,64))
_ROW_W2 = _ROW_W1 + LANES                     # W2: rows 136..263 (128x128, real (64,32))
_ROW_WO = _ROW_W2 + LANES                     # Wo: rows 264..391 (128x128, real (32,2))
_N_ROWS = _ROW_WO + LANES                     # 392 rows total (multiple of 8)


def _bn_train(h, gamma, beta):
    """Train-mode BatchNorm1d: one-pass biased batch stats + fused affine."""
    inv_b = 1.0 / h.shape[0]
    mu = jnp.sum(h, axis=0, keepdims=True) * inv_b
    msq = jnp.sum(h * h, axis=0, keepdims=True) * inv_b
    var = msq - mu * mu
    scale = gamma * jax.lax.rsqrt(var + BN_EPS)
    shift = beta - mu * scale
    return h * scale + shift


def _leaky_relu(z):
    return jnp.maximum(z, NEG_SLOPE * z)


def pred_td_kernel(x_ref, p_ref, out_ref):
    h = x_ref[...]                               # (B, 128) f32; lanes >= 32 are zero

    g1 = p_ref[_ROW_G1:_ROW_G1 + 1, :]
    be1 = p_ref[_ROW_BE1:_ROW_BE1 + 1, :]
    b1 = p_ref[_ROW_B1:_ROW_B1 + 1, :]
    g2 = p_ref[_ROW_G2:_ROW_G2 + 1, :]
    be2 = p_ref[_ROW_BE2:_ROW_BE2 + 1, :]
    b2 = p_ref[_ROW_B2:_ROW_B2 + 1, :]
    bo = p_ref[_ROW_BO:_ROW_BO + 1, :]
    msk = p_ref[_ROW_MASK:_ROW_MASK + 1, :]
    w1 = p_ref[_ROW_W1:_ROW_W1 + LANES, :]
    w2 = p_ref[_ROW_W2:_ROW_W2 + LANES, :]
    wo = p_ref[_ROW_WO:_ROW_WO + LANES, :]

    # --- block 1: bn2 -> fc2 -> leaky_relu(0.2) ---
    h = _bn_train(h, g1, be1)
    h = _leaky_relu(jnp.dot(h, w1, preferred_element_type=jnp.float32) + b1)

    # --- block 2: bn3 -> fc3 -> leaky_relu(0.2) ---
    h = _bn_train(h, g2, be2)
    h = _leaky_relu(jnp.dot(h, w2, preferred_element_type=jnp.float32) + b2)

    # --- fc_outp + masked softmax over the full 128-lane block ---
    z = jnp.dot(h, wo, preferred_element_type=jnp.float32) + bo + msk
    z = z - jnp.max(z, axis=1, keepdims=True)
    e = jnp.exp(z)
    out_ref[...] = e / jnp.sum(e, axis=1, keepdims=True)


def pred_td_forward(x, packed):
    B, F = x.shape
    # lane-dense activation: zero-pad feature dim 32 -> 128 (wrapper-side plumbing)
    x_pad = jnp.zeros((B, LANES), jnp.float32).at[:, :F].set(x.astype(jnp.float32))
    vmem = pl.BlockSpec(memory_space=pltpu.VMEM)
    out_pad = pl.pallas_call(
        pred_td_kernel,
        out_shape=jax.ShapeDtypeStruct((B, LANES), jnp.float32),
        in_specs=[vmem, vmem],
        out_specs=vmem,
    )(x_pad, packed)
    return out_pad[:, :2]


def make_params(key, in_dim, structure):
    """Deterministic synthetic parameters; returns (packed slab, raw params)."""
    dims = [in_dim] + list(structure)            # [32, 64, 32]
    n_keys = 4 * (len(dims) - 1) + 2
    keys = jax.random.split(key, n_keys)
    ki = iter(range(n_keys))

    raw = []                                      # unpadded, for the pure-JAX reference
    slab = jnp.zeros((_N_ROWS, LANES), jnp.float32)
    vec_rows = [(_ROW_G1, _ROW_BE1, _ROW_B1), (_ROW_G2, _ROW_BE2, _ROW_B2)]
    w_rows = [_ROW_W1, _ROW_W2]

    for i in range(1, len(dims)):
        d_in, d_out = dims[i - 1], dims[i]
        gamma = 1.0 + 0.1 * jax.random.normal(keys[next(ki)], (d_in,), jnp.float32)
        beta = 0.1 * jax.random.normal(keys[next(ki)], (d_in,), jnp.float32)
        w = 0.1 * jax.random.normal(keys[next(ki)], (d_in, d_out), jnp.float32)
        b = 0.1 * jax.random.normal(keys[next(ki)], (d_out,), jnp.float32)
        raw.append((gamma, beta, w, b))
        rg, rbe, rb = vec_rows[i - 1]
        slab = slab.at[rg, :d_in].set(gamma)      # padded gamma = 0 -> padded lanes stay 0
        slab = slab.at[rbe, :d_in].set(beta)
        slab = slab.at[rb, :d_out].set(b)
        slab = slab.at[w_rows[i - 1]:w_rows[i - 1] + d_in, :d_out].set(w)

    wo = 0.1 * jax.random.normal(keys[next(ki)], (dims[-1], 2), jnp.float32)
    bo = 0.1 * jax.random.normal(keys[next(ki)], (2,), jnp.float32)
    raw.append((wo, bo))
    slab = slab.at[_ROW_BO, :2].set(bo)
    slab = slab.at[_ROW_WO:_ROW_WO + dims[-1], :2].set(wo)

    # additive softmax mask: 0 on the 2 real logit lanes, -1e30 on the padded lanes
    mask = jnp.where(jnp.arange(LANES) < 2, 0.0, NEG_BIG).astype(jnp.float32)
    slab = slab.at[_ROW_MASK, :].set(mask)
    return slab, raw


def reference_forward(x, raw):
    """Pure-JAX reference of the PyTorch forward (two-pass BN, exact softmax)."""
    h = x
    for gamma, beta, w, b in raw[:-1]:
        mu = jnp.mean(h, axis=0, keepdims=True)
        var = jnp.mean((h - mu) ** 2, axis=0, keepdims=True)
        h = (h - mu) / jnp.sqrt(var + BN_EPS) * gamma + beta
        h = h @ w + b
        h = jnp.where(h >= 0, h, NEG_SLOPE * h)
    wo, bo = raw[-1]
    z = h @ wo + bo
    z = z - jnp.max(z, axis=1, keepdims=True)
    e = jnp.exp(z)
    return e / jnp.sum(e, axis=1, keepdims=True)


if __name__ == "__main__":
    IN_DIM = 32
    STRUCTURE = [64, 32]
    B = 8

    key = jax.random.PRNGKey(0)
    k_x, k_p = jax.random.split(key)
    x = jax.random.normal(k_x, (B, IN_DIM), jnp.float32)
    packed, raw = make_params(k_p, IN_DIM, STRUCTURE)

    out = pred_td_forward(x, packed)
    out = jax.block_until_ready(out)

    ref = reference_forward(x, raw)
    assert out.shape == (B, 2)
    assert np.allclose(np.asarray(out), np.asarray(ref), atol=1e-4, rtol=1e-4)
    assert np.allclose(np.asarray(out).sum(axis=1), 1.0, atol=1e-5)

    print("KERNEL_OK")
</pallas_src>

<mosaic_0001>
module attributes {stable_mosaic.version = 11 : i64} {
  func.func @pred_td_kernel(%arg0: memref<8x128xf32, #tpu.memory_space<vmem>>, %arg1: memref<392x128xf32, #tpu.memory_space<vmem>>, %arg2: memref<8x128xf32, #tpu.memory_space<vmem>>) attributes {dimension_semantics = [], scalar_prefetch = 0 : i64, scratch_operands = 0 : i64, tpu.core_type = #tpu.core_type<tc>} {
    %c0 = arith.constant 0 : index
    %c0_0 = arith.constant 0 : index
    %0 = vector.load %arg0[%c0, %c0_0] : memref<8x128xf32, #tpu.memory_space<vmem>>, vector<8x128xf32>
    %c0_1 = arith.constant 0 : index
    %c0_2 = arith.constant 0 : index
    %1 = vector.load %arg1[%c0_1, %c0_2] : memref<392x128xf32, #tpu.memory_space<vmem>>, vector<1x128xf32>
    %c1 = arith.constant 1 : index
    %c0_3 = arith.constant 0 : index
    %2 = vector.load %arg1[%c1, %c0_3] : memref<392x128xf32, #tpu.memory_space<vmem>>, vector<1x128xf32>
    %c2 = arith.constant 2 : index
    %c0_4 = arith.constant 0 : index
    %3 = vector.load %arg1[%c2, %c0_4] : memref<392x128xf32, #tpu.memory_space<vmem>>, vector<1x128xf32>
    %c3 = arith.constant 3 : index
    %c0_5 = arith.constant 0 : index
    %4 = vector.load %arg1[%c3, %c0_5] : memref<392x128xf32, #tpu.memory_space<vmem>>, vector<1x128xf32>
    %c4 = arith.constant 4 : index
    %c0_6 = arith.constant 0 : index
    %5 = vector.load %arg1[%c4, %c0_6] : memref<392x128xf32, #tpu.memory_space<vmem>>, vector<1x128xf32>
    %c5 = arith.constant 5 : index
    %c0_7 = arith.constant 0 : index
    %6 = vector.load %arg1[%c5, %c0_7] : memref<392x128xf32, #tpu.memory_space<vmem>>, vector<1x128xf32>
    %c6 = arith.constant 6 : index
    %c0_8 = arith.constant 0 : index
    %7 = vector.load %arg1[%c6, %c0_8] : memref<392x128xf32, #tpu.memory_space<vmem>>, vector<1x128xf32>
    %c7 = arith.constant 7 : index
    %c0_9 = arith.constant 0 : index
    %8 = vector.load %arg1[%c7, %c0_9] : memref<392x128xf32, #tpu.memory_space<vmem>>, vector<1x128xf32>
    %c8 = arith.constant 8 : index
    %c0_10 = arith.constant 0 : index
    %9 = vector.load %arg1[%c8, %c0_10] : memref<392x128xf32, #tpu.memory_space<vmem>>, vector<128x128xf32>
    %c136 = arith.constant 136 : index
    %c0_11 = arith.constant 0 : index
    %10 = vector.load %arg1[%c136, %c0_11] : memref<392x128xf32, #tpu.memory_space<vmem>>, vector<128x128xf32>
    %c264 = arith.constant 264 : index
    %c0_12 = arith.constant 0 : index
    %11 = vector.load %arg1[%c264, %c0_12] : memref<392x128xf32, #tpu.memory_space<vmem>>, vector<128x128xf32>
    %cst = arith.constant dense<0.000000e+00> : vector<128xf32>
    %12 = vector.multi_reduction <add>, %0, %cst [0] : vector<8x128xf32> to vector<128xf32>
    %13 = vector.shape_cast %12 : vector<128xf32> to vector<1x128xf32>
    %cst_13 = arith.constant 1.250000e-01 : f32
    %14 = vector.broadcast %cst_13 : f32 to vector<1x128xf32>
    %15 = arith.mulf %13, %14 : vector<1x128xf32>
    %16 = arith.mulf %0, %0 : vector<8x128xf32>
    %cst_14 = arith.constant dense<0.000000e+00> : vector<128xf32>
    %17 = vector.multi_reduction <add>, %16, %cst_14 [0] : vector<8x128xf32> to vector<128xf32>
    %18 = vector.shape_cast %17 : vector<128xf32> to vector<1x128xf32>
    %cst_15 = arith.constant 1.250000e-01 : f32
    %19 = vector.broadcast %cst_15 : f32 to vector<1x128xf32>
    %20 = arith.mulf %18, %19 : vector<1x128xf32>
    %21 = arith.mulf %15, %15 : vector<1x128xf32>
    %22 = arith.subf %20, %21 : vector<1x128xf32>
    %cst_16 = arith.constant 9.99999974E-6 : f32
    %23 = vector.broadcast %cst_16 : f32 to vector<1x128xf32>
    %24 = arith.addf %22, %23 : vector<1x128xf32>
    %25 = math.rsqrt %24 : vector<1x128xf32>
    %26 = arith.mulf %1, %25 : vector<1x128xf32>
    %27 = arith.mulf %15, %26 : vector<1x128xf32>
    %28 = arith.subf %2, %27 : vector<1x128xf32>
    %29 = vector.broadcast %26 : vector<1x128xf32> to vector<8x128xf32>
    %30 = arith.mulf %0, %29 : vector<8x128xf32>
    %31 = vector.broadcast %28 : vector<1x128xf32> to vector<8x128xf32>
    %32 = arith.addf %30, %31 : vector<8x128xf32>
    %cst_17 = arith.constant dense<0.000000e+00> : vector<8x128xf32>
    %33 = tpu.matmul %32, %9, %cst_17 {dimension_numbers = #tpu.dot_dimension_numbers<[1], [0], [0], [1], [0, 0, 1, 1], [], []>} : vector<8x128xf32>, vector<128x128xf32>, vector<8x128xf32> -> vector<8x128xf32>
    %34 = vector.broadcast %3 : vector<1x128xf32> to vector<8x128xf32>
    %35 = arith.addf %33, %34 : vector<8x128xf32>
    %cst_18 = arith.constant 2.000000e-01 : f32
    %36 = vector.broadcast %cst_18 : f32 to vector<8x128xf32>
    %37 = arith.mulf %36, %35 : vector<8x128xf32>
    %38 = arith.maximumf %35, %37 : vector<8x128xf32>
    %cst_19 = arith.constant dense<0.000000e+00> : vector<128xf32>
    %39 = vector.multi_reduction <add>, %38, %cst_19 [0] : vector<8x128xf32> to vector<128xf32>
    %40 = vector.shape_cast %39 : vector<128xf32> to vector<1x128xf32>
    %cst_20 = arith.constant 1.250000e-01 : f32
    %41 = vector.broadcast %cst_20 : f32 to vector<1x128xf32>
    %42 = arith.mulf %40, %41 : vector<1x128xf32>
    %43 = arith.mulf %38, %38 : vector<8x128xf32>
    %cst_21 = arith.constant dense<0.000000e+00> : vector<128xf32>
    %44 = vector.multi_reduction <add>, %43, %cst_21 [0] : vector<8x128xf32> to vector<128xf32>
    %45 = vector.shape_cast %44 : vector<128xf32> to vector<1x128xf32>
    %cst_22 = arith.constant 1.250000e-01 : f32
    %46 = vector.broadcast %cst_22 : f32 to vector<1x128xf32>
    %47 = arith.mulf %45, %46 : vector<1x128xf32>
    %48 = arith.mulf %42, %42 : vector<1x128xf32>
    %49 = arith.subf %47, %48 : vector<1x128xf32>
    %cst_23 = arith.constant 9.99999974E-6 : f32
    %50 = vector.broadcast %cst_23 : f32 to vector<1x128xf32>
    %51 = arith.addf %49, %50 : vector<1x128xf32>
    %52 = math.rsqrt %51 : vector<1x128xf32>
    %53 = arith.mulf %4, %52 : vector<1x128xf32>
    %54 = arith.mulf %42, %53 : vector<1x128xf32>
    %55 = arith.subf %5, %54 : vector<1x128xf32>
    %56 = vector.broadcast %53 : vector<1x128xf32> to vector<8x128xf32>
    %57 = arith.mulf %38, %56 : vector<8x128xf32>
    %58 = vector.broadcast %55 : vector<1x128xf32> to vector<8x128xf32>
    %59 = arith.addf %57, %58 : vector<8x128xf32>
    %cst_24 = arith.constant dense<0.000000e+00> : vector<8x128xf32>
    %60 = tpu.matmul %59, %10, %cst_24 {dimension_numbers = #tpu.dot_dimension_numbers<[1], [0], [0], [1], [0, 0, 1, 1], [], []>} : vector<8x128xf32>, vector<128x128xf32>, vector<8x128xf32> -> vector<8x128xf32>
    %61 = vector.broadcast %6 : vector<1x128xf32> to vector<8x128xf32>
    %62 = arith.addf %60, %61 : vector<8x128xf32>
    %cst_25 = arith.constant 2.000000e-01 : f32
    %63 = vector.broadcast %cst_25 : f32 to vector<8x128xf32>
    %64 = arith.mulf %63, %62 : vector<8x128xf32>
    %65 = arith.maximumf %62, %64 : vector<8x128xf32>
    %cst_26 = arith.constant dense<0.000000e+00> : vector<8x128xf32>
    %66 = tpu.matmul %65, %11, %cst_26 {dimension_numbers = #tpu.dot_dimension_numbers<[1], [0], [0], [1], [0, 0, 1, 1], [], []>} : vector<8x128xf32>, vector<128x128xf32>, vector<8x128xf32> -> vector<8x128xf32>
    %67 = vector.broadcast %7 : vector<1x128xf32> to vector<8x128xf32>
    %68 = arith.addf %66, %67 : vector<8x128xf32>
    %69 = vector.broadcast %8 : vector<1x128xf32> to vector<8x128xf32>
    %70 = arith.addf %68, %69 : vector<8x128xf32>
    %cst_27 = arith.constant dense<0xFF800000> : vector<8xf32>
    %71 = vector.multi_reduction <maximumf>, %70, %cst_27 [1] : vector<8x128xf32> to vector<8xf32>
    %72 = vector.shape_cast %71 : vector<8xf32> to vector<8x1xf32>
    %73 = vector.broadcast %72 : vector<8x1xf32> to vector<8x128xf32>
    %74 = arith.subf %70, %73 : vector<8x128xf32>
    %75 = math.exp %74 : vector<8x128xf32>
    %cst_28 = arith.constant dense<0.000000e+00> : vector<8xf32>
    %76 = vector.multi_reduction <add>, %75, %cst_28 [1] : vector<8x128xf32> to vector<8xf32>
    %77 = vector.shape_cast %76 : vector<8xf32> to vector<8x1xf32>
    %78 = vector.broadcast %77 : vector<8x1xf32> to vector<8x128xf32>
    %79 = arith.divf %75, %78 : vector<8x128xf32>
    %c0_29 = arith.constant 0 : index
    %c0_30 = arith.constant 0 : index
    %80 = vector.load %arg2[%c0_29, %c0_30] : memref<8x128xf32, #tpu.memory_space<vmem>>, vector<8x128xf32>
    tpu.vector_store %arg2[%c0_29, %c0_30], %79 {strides = array<i32>} : memref<8x128xf32, #tpu.memory_space<vmem>>, vector<8x128xf32>,
    return
  }
}

</mosaic_0001>

<llo_original>
// kernel: tpu_custom_call.1
$region0: #{tpu_custom_call.1}
  #allocation0 [shape = 'u32[]', space=smem, size = 0x4, offset = 0x4, fixed_abs, tag = 'smem constant byte address 0x4 - core index']
  #allocation1 [shape = 'u32[144,128]{1,0:T(1,128)}', space=vmem, size = 0x12000, scoped, tag = 'internal scratch']
  %s0 = inlined_call_operand.hbm [shape: f32[8,128], index: 0, kind: input, shape index: {}]
  %s1 = inlined_call_operand.hbm [shape: f32[392,128], index: 1, kind: input, shape index: {}]
  %s2 = inlined_call_operand.hbm [shape: f32[8,128], index: 2, kind: output, shape index: {}]
  %s3 = sld [smem:[#allocation0]]
  $region26: #{tpu_custom_call.1} parent=0
    _
  %s5 = ssub.s32 1, %s3
  %s6 = scalar_select 0, %s5, %s3
  $region1: #{tpu_custom_call.1} parent=0
    #allocation2 [shape = 'u8[4096]{0}', space=vmem, size = 0x1000, scoped, tag = 'input window, operand 0, single buffered']
    #allocation3 [shape = 's32[1]{0}', space=sflag, size = 0x4, scoped, tag = 'scoped memory for tpu_custom_call.1']
    #allocation4 [shape = 's32[1]{0}', space=sflag, size = 0x4, scoped, tag = 'scoped memory for tpu_custom_call.1']
    #allocation5 [shape = 'u8[200704]{0}', space=vmem, size = 0x31000, scoped, tag = 'input window, operand 1, single buffered']
    #allocation6 [shape = 's32[1]{0}', space=sflag, size = 0x4, scoped, tag = 'scoped memory for tpu_custom_call.1']
    #allocation7 [shape = 'u8[4096]{0}', space=vmem, size = 0x1000, scoped, tag = 'output window, operand 0, single buffered']
    %7 = vsyncpa [#allocation3], 0
    %8 = vsyncpa [#allocation6], 0
    %9 = vsyncpa [#allocation4], 0
    // Predicated region
    $region2: #{tpu_custom_call.1} parent=1 // pred_check
      _
    $region3: #{tpu_custom_call.1} parent=1 // pred_check_branch
      %11 = sbr.rel (0) target = $region5
    $region4: #{tpu_custom_call.1} parent=1 // pred_region
      %s13 = ssub.s32 128, 128
      %14 = vsyncadd [#allocation3], %s13
      %s16 = sshll.u32 [#allocation2], 4
      %s17 = int_to_ptr.vmem [resolvable:$true] %s16
      %19 = dma.hbm_to_vmem [thread:$0]  %s0, 128, %s17, [#allocation3]
    $region5: #{tpu_custom_call.1} parent=1 // pred_fallthru
      _
    // Predicated region
    $region6: #{tpu_custom_call.1} parent=1 // pred_check
      _
    $region7: #{tpu_custom_call.1} parent=1 // pred_check_branch
      %21 = sbr.rel (0) target = $region9
    $region8: #{tpu_custom_call.1} parent=1 // pred_region
      %s23 = ssub.s32 6272, 6272
      %24 = vsyncadd [#allocation6], %s23
      %s25 = sshll.u32 [#allocation5], 4
      %s26 = int_to_ptr.vmem [resolvable:$true] %s25
      %31 = dma.hbm_to_vmem [thread:$0]  %s1, 6272, %s26, [#allocation6], 128, 128, 8
    $region9: #{tpu_custom_call.1} parent=1 // pred_fallthru
      _
    // Predicated region
    $region10: #{tpu_custom_call.1} parent=1 // pred_check
      _
    $region11: #{tpu_custom_call.1} parent=1 // pred_check_branch
      %33 = sbr.rel (0) target = $region13
    $region12: #{tpu_custom_call.1} parent=1 // pred_region
      %34 = dma.done [#allocation3], 128
    $region13: #{tpu_custom_call.1} parent=1 // pred_fallthru
      _
    // Predicated region
    $region14: #{tpu_custom_call.1} parent=1 // pred_check
      _
    $region15: #{tpu_custom_call.1} parent=1 // pred_check_branch
      %36 = sbr.rel (0) target = $region17
    $region16: #{tpu_custom_call.1} parent=1 // pred_region
      %37 = dma.done [#allocation6], 6272
    $region17: #{tpu_custom_call.1} parent=1 // pred_fallthru
      _
    %v38 = vld [vmem:[#allocation2] sm:$0xff]
    %v39 = vld [vmem:[#allocation5] sm:$0x1]
    %v40 = vld [vmem:[#allocation5 + $0x1] sm:$0x1]
    %v41 = vld [vmem:[#allocation5 + $0x2] sm:$0x1]
    %v42 = vld [vmem:[#allocation5 + $0x3] sm:$0x1]
    %v43 = vld [vmem:[#allocation5 + $0x4] sm:$0x1]
    %v44 = vld [vmem:[#allocation5 + $0x5] sm:$0x1]
    %v45 = vld [vmem:[#allocation5 + $0x6] sm:$0x1]
    %v46 = vld [vmem:[#allocation5 + $0x7] sm:$0x1]
    %v47 = vld [vmem:[#allocation5 + $0x8] sm:$0xff]
    %v48 = vld [vmem:[#allocation5 + $0x10] sm:$0xff]
    %v49 = vld [vmem:[#allocation5 + $0x18] sm:$0xff]
    %v50 = vld [vmem:[#allocation5 + $0x20] sm:$0xff]
    %v51 = vld [vmem:[#allocation5 + $0x28] sm:$0xff]
    %v52 = vld [vmem:[#allocation5 + $0x30] sm:$0xff]
    %v53 = vld [vmem:[#allocation5 + $0x38] sm:$0xff]
    %v54 = vld [vmem:[#allocation5 + $0x40] sm:$0xff]
    %v55 = vld [vmem:[#allocation5 + $0x48] sm:$0xff]
    %v56 = vld [vmem:[#allocation5 + $0x50] sm:$0xff]
    %v57 = vld [vmem:[#allocation5 + $0x58] sm:$0xff]
    %v58 = vld [vmem:[#allocation5 + $0x60] sm:$0xff]
    %v59 = vld [vmem:[#allocation5 + $0x68] sm:$0xff]
    %v60 = vld [vmem:[#allocation5 + $0x70] sm:$0xff]
    %v61 = vld [vmem:[#allocation5 + $0x78] sm:$0xff]
    %v62 = vld [vmem:[#allocation5 + $0x80] sm:$0xff]
    %v63 = vld [vmem:[#allocation5 + $0x88] sm:$0xff]
    %v64 = vld [vmem:[#allocation5 + $0x90] sm:$0xff]
    %v65 = vld [vmem:[#allocation5 + $0x98] sm:$0xff]
    %v66 = vld [vmem:[#allocation5 + $0xa0] sm:$0xff]
    %v67 = vld [vmem:[#allocation5 + $0xa8] sm:$0xff]
    %v68 = vld [vmem:[#allocation5 + $0xb0] sm:$0xff]
    %v69 = vld [vmem:[#allocation5 + $0xb8] sm:$0xff]
    %v70 = vld [vmem:[#allocation5 + $0xc0] sm:$0xff]
    %v71 = vld [vmem:[#allocation5 + $0xc8] sm:$0xff]
    %v72 = vld [vmem:[#allocation5 + $0xd0] sm:$0xff]
    %v73 = vld [vmem:[#allocation5 + $0xd8] sm:$0xff]
    %v74 = vld [vmem:[#allocation5 + $0xe0] sm:$0xff]
    %v75 = vld [vmem:[#allocation5 + $0xe8] sm:$0xff]
    %v76 = vld [vmem:[#allocation5 + $0xf0] sm:$0xff]
    %v77 = vld [vmem:[#allocation5 + $0xf8] sm:$0xff]
    %v78 = vld [vmem:[#allocation5 + $0x100] sm:$0xff]
    %v79 = vld [vmem:[#allocation5 + $0x108] sm:$0xff]
    %v80 = vld [vmem:[#allocation5 + $0x110] sm:$0xff]
    %v81 = vld [vmem:[#allocation5 + $0x118] sm:$0xff]
    %v82 = vld [vmem:[#allocation5 + $0x120] sm:$0xff]
    %v83 = vld [vmem:[#allocation5 + $0x128] sm:$0xff]
    %v84 = vld [vmem:[#allocation5 + $0x130] sm:$0xff]
    %v85 = vld [vmem:[#allocation5 + $0x138] sm:$0xff]
    %v86 = vld [vmem:[#allocation5 + $0x140] sm:$0xff]
    %v87 = vld [vmem:[#allocation5 + $0x148] sm:$0xff]
    %v88 = vld [vmem:[#allocation5 + $0x150] sm:$0xff]
    %v89 = vld [vmem:[#allocation5 + $0x158] sm:$0xff]
    %v90 = vld [vmem:[#allocation5 + $0x160] sm:$0xff]
    %v91 = vld [vmem:[#allocation5 + $0x168] sm:$0xff]
    %v92 = vld [vmem:[#allocation5 + $0x170] sm:$0xff]
    %v93 = vld [vmem:[#allocation5 + $0x178] sm:$0xff]
    %v94 = vld [vmem:[#allocation5 + $0x180] sm:$0xff]
    %v95 = vrot.slane %v38, 4
    %v96 = vadd.f32 %v38, %v95
    %v97 = vrot.slane %v96, 2
    %v98 = vadd.f32 %v96, %v97
    %v99 = vrot.slane %v98, 1
    %v100 = vadd.f32 %v98, %v99
    %v101 = vmul.f32 %v100, 0.125
    %v102 = vmul.f32 %v38, %v38
    %v103 = vrot.slane %v102, 4
    %v104 = vadd.f32 %v102, %v103
    %v105 = vrot.slane %v104, 2
    %v106 = vadd.f32 %v104, %v105
    %v107 = vrot.slane %v106, 1
    %v108 = vadd.f32 %v106, %v107
    %v109 = vmul.f32 %v108, 0.125
    %v110 = vmul.f32 %v101, %v101
    %v111 = vsub.f32 %v109, %v110
    %v112 = vadd.f32 %v111, 1e-05
    %v113 = vrsqrt.pop %v112
    %v114 = vmul.f32 %v39, %v113
    %v115 = vmul.f32 %v101, %v114
    %v116 = vsub.f32 %v40, %v115
    %v117 = vlaneseq
    %v118 = vshrl.u32 %v117, 7
    %v119 = vsub.s32 0, %v118
    %v120 = vrot.slane %v114, %v119
    %v121 = vmul.f32 %v38, %v120
    %v122 = vlaneseq
    %v123 = vshrl.u32 %v122, 7
    %v124 = vsub.s32 0, %v123
    %v125 = vrot.slane %v116, %v124
    %v126 = vadd.f32 %v121, %v125
    %v127 = vlaneseq
    %v128 = vshrl.u32 %v127, 7
    %v129 = vsub.s32 0, %v128
    %v130 = vrot.slane %v41, %v129
    %131 = vmatprep.subr.mxu0 0.0
    %132 = vmatpush1.msra.mxu0 %v47
    %133 = vmatprep.subr.mxu0 0.0
    %134 = vmatpush1.msra.mxu0 %v48
    %135 = vmatprep.subr.mxu0 0.0
    %136 = vmatpush1.msra.mxu0 %v49
    %137 = vmatprep.subr.mxu0 0.0
    %138 = vmatpush1.msra.mxu0 %v50
    %139 = vmatprep.subr.mxu0 0.0
    %140 = vmatpush1.msra.mxu0 %v51
    %141 = vmatprep.subr.mxu0 0.0
    %142 = vmatpush1.msra.mxu0 %v52
    %143 = vmatprep.subr.mxu0 0.0
    %144 = vmatpush1.msra.mxu0 %v53
    %145 = vmatprep.subr.mxu0 0.0
    %146 = vmatpush1.msra.mxu0 %v54
    %147 = vmatprep.subr.mxu0 0.0
    %148 = vmatpush1.msra.mxu0 %v55
    %149 = vmatprep.subr.mxu0 0.0
    %150 = vmatpush1.msra.mxu0 %v56
    %151 = vmatprep.subr.mxu0 0.0
    %152 = vmatpush1.msra.mxu0 %v57
    %153 = vmatprep.subr.mxu0 0.0
    %154 = vmatpush1.msra.mxu0 %v58
    %155 = vmatprep.subr.mxu0 0.0
    %156 = vmatpush1.msra.mxu0 %v59
    %157 = vmatprep.subr.mxu0 0.0
    %158 = vmatpush1.msra.mxu0 %v60
    %159 = vmatprep.subr.mxu0 0.0
    %160 = vmatpush1.msra.mxu0 %v61
    %161 = vmatprep.subr.mxu0 0.0
    %162 = vmatpush1.msra.mxu0 %v62
    %163 = vmatprep.subr.mxu0 0.0
    %164 = vmatpush1.msra.mxu0 0.0
    %165 = vmatprep.subr.mxu0 0.0
    %166 = vmatpush1.msra.mxu0 0.0
    %167 = vmatprep.subr.mxu0 0.0
    %168 = vmatpush1.msra.mxu0 0.0
    %169 = vmatprep.subr.mxu0 0.0
    %170 = vmatpush1.msra.mxu0 0.0
    %171 = vmatprep.subr.mxu0 0.0
    %172 = vmatpush1.msra.mxu0 0.0
    %173 = vmatprep.subr.mxu0 0.0
    %174 = vmatpush1.msra.mxu0 0.0
    %175 = vmatprep.subr.mxu0 0.0
    %176 = vmatpush1.msra.mxu0 0.0
    %177 = vmatprep.subr.mxu0 0.0
    %178 = vmatpush1.msra.mxu0 0.0
    %179 = vmatprep.subr.mxu0 0.0
    %180 = vmatpush1.msra.mxu0 0.0
    %181 = vmatprep.subr.mxu0 0.0
    %182 = vmatpush1.msra.mxu0 0.0
    %183 = vmatprep.subr.mxu0 0.0
    %184 = vmatpush1.msra.mxu0 0.0
    %185 = vmatprep.subr.mxu0 0.0
    %186 = vmatpush1.msra.mxu0 0.0
    %187 = vmatprep.subr.mxu0 0.0
    %188 = vmatpush1.msra.mxu0 0.0
    %189 = vmatprep.subr.mxu0 0.0
    %190 = vmatpush1.msra.mxu0 0.0
    %191 = vmatprep.subr.mxu0 0.0
    %192 = vmatpush1.msra.mxu0 0.0
    %193 = vmatprep.subr.mxu0 0.0
    %194 = vmatpush1.msra.mxu0 0.0
    %195 = vmatprep.mubr.f32.mxu0 0.0
    %196 = vmatmul.mubr.f32.gmra.mrb[0].mxu0 %v126
    %v197 = vpop.f32.mrb[0].mxu0
    %v198 = vadd.f32 %v130, %v197
    %v199 = vpop.f32.mrb[0].mxu0
    %200 = vdwg.mxu0
    %v201 = vmul.f32 %v198, 0.2
    %v202 = vmax.f32 %v198, %v201
    %v203 = vrot.slane %v202, 4
    %v204 = vadd.f32 %v202, %v203
    %v205 = vrot.slane %v204, 2
    %v206 = vadd.f32 %v204, %v205
    %v207 = vrot.slane %v206, 1
    %v208 = vadd.f32 %v206, %v207
    %v209 = vmul.f32 %v208, 0.125
    %v210 = vmul.f32 %v202, %v202
    %v211 = vrot.slane %v210, 4
    %v212 = vadd.f32 %v210, %v211
    %v213 = vrot.slane %v212, 2
    %v214 = vadd.f32 %v212, %v213
    %v215 = vrot.slane %v214, 1
    %v216 = vadd.f32 %v214, %v215
    %v217 = vmul.f32 %v216, 0.125
    %v218 = vmul.f32 %v209, %v209
    %v219 = vsub.f32 %v217, %v218
    %v220 = vadd.f32 %v219, 1e-05
    %v221 = vrsqrt.pop %v220
    %v222 = vmul.f32 %v42, %v221
    %v223 = vmul.f32 %v209, %v222
    %v224 = vsub.f32 %v43, %v223
    %v225 = vlaneseq
    %v226 = vshrl.u32 %v225, 7
    %v227 = vsub.s32 0, %v226
    %v228 = vrot.slane %v222, %v227
    %v229 = vmul.f32 %v202, %v228
    %v230 = vlaneseq
    %v231 = vshrl.u32 %v230, 7
    %v232 = vsub.s32 0, %v231
    %v233 = vrot.slane %v224, %v232
    %v234 = vadd.f32 %v229, %v233
    %v235 = vlaneseq
    %v236 = vshrl.u32 %v235, 7
    %v237 = vsub.s32 0, %v236
    %v238 = vrot.slane %v44, %v237
    %239 = vmatprep.subr.mxu0 0.0
    %240 = vmatpush1.msra.mxu0 %v63
    %241 = vmatprep.subr.mxu0 0.0
    %242 = vmatpush1.msra.mxu0 %v64
    %243 = vmatprep.subr.mxu0 0.0
    %244 = vmatpush1.msra.mxu0 %v65
    %245 = vmatprep.subr.mxu0 0.0
    %246 = vmatpush1.msra.mxu0 %v66
    %247 = vmatprep.subr.mxu0 0.0
    %248 = vmatpush1.msra.mxu0 %v67
    %249 = vmatprep.subr.mxu0 0.0
    %250 = vmatpush1.msra.mxu0 %v68
    %251 = vmatprep.subr.mxu0 0.0
    %252 = vmatpush1.msra.mxu0 %v69
    %253 = vmatprep.subr.mxu0 0.0
    %254 = vmatpush1.msra.mxu0 %v70
    %255 = vmatprep.subr.mxu0 0.0
    %256 = vmatpush1.msra.mxu0 %v71
    %257 = vmatprep.subr.mxu0 0.0
    %258 = vmatpush1.msra.mxu0 %v72
    %259 = vmatprep.subr.mxu0 0.0
    %260 = vmatpush1.msra.mxu0 %v73
    %261 = vmatprep.subr.mxu0 0.0
    %262 = vmatpush1.msra.mxu0 %v74
    %263 = vmatprep.subr.mxu0 0.0
    %264 = vmatpush1.msra.mxu0 %v75
    %265 = vmatprep.subr.mxu0 0.0
    %266 = vmatpush1.msra.mxu0 %v76
    %267 = vmatprep.subr.mxu0 0.0
    %268 = vmatpush1.msra.mxu0 %v77
    %269 = vmatprep.subr.mxu0 0.0
    %270 = vmatpush1.msra.mxu0 %v78
    %271 = vmatprep.subr.mxu0 0.0
    %272 = vmatpush1.msra.mxu0 0.0
    %273 = vmatprep.subr.mxu0 0.0
    %274 = vmatpush1.msra.mxu0 0.0
    %275 = vmatprep.subr.mxu0 0.0
    %276 = vmatpush1.msra.mxu0 0.0
    %277 = vmatprep.subr.mxu0 0.0
    %278 = vmatpush1.msra.mxu0 0.0
    %279 = vmatprep.subr.mxu0 0.0
    %280 = vmatpush1.msra.mxu0 0.0
    %281 = vmatprep.subr.mxu0 0.0
    %282 = vmatpush1.msra.mxu0 0.0
    %283 = vmatprep.subr.mxu0 0.0
    %284 = vmatpush1.msra.mxu0 0.0
    %285 = vmatprep.subr.mxu0 0.0
    %286 = vmatpush1.msra.mxu0 0.0
    %287 = vmatprep.subr.mxu0 0.0
    %288 = vmatpush1.msra.mxu0 0.0
    %289 = vmatprep.subr.mxu0 0.0
    %290 = vmatpush1.msra.mxu0 0.0
    %291 = vmatprep.subr.mxu0 0.0
    %292 = vmatpush1.msra.mxu0 0.0
    %293 = vmatprep.subr.mxu0 0.0
    %294 = vmatpush1.msra.mxu0 0.0
    %295 = vmatprep.subr.mxu0 0.0
    %296 = vmatpush1.msra.mxu0 0.0
    %297 = vmatprep.subr.mxu0 0.0
    %298 = vmatpush1.msra.mxu0 0.0
    %299 = vmatprep.subr.mxu0 0.0
    %300 = vmatpush1.msra.mxu0 0.0
    %301 = vmatprep.subr.mxu0 0.0
    %302 = vmatpush1.msra.mxu0 0.0
    %303 = vmatprep.mubr.f32.mxu0 0.0
    %304 = vmatmul.mubr.f32.gmra.mrb[0].mxu0 %v234
    %v305 = vpop.f32.mrb[0].mxu0
    %v306 = vadd.f32 %v238, %v305
    %v307 = vpop.f32.mrb[0].mxu0
    %308 = vdwg.mxu0
    %v309 = vmul.f32 %v306, 0.2
    %v310 = vmax.f32 %v306, %v309
    %v311 = vlaneseq
    %v312 = vshrl.u32 %v311, 7
    %v313 = vsub.s32 0, %v312
    %v314 = vrot.slane %v45, %v313
    %315 = vmatprep.subr.mxu0 0.0
    %316 = vmatpush1.msra.mxu0 %v79
    %317 = vmatprep.subr.mxu0 0.0
    %318 = vmatpush1.msra.mxu0 %v80
    %319 = vmatprep.subr.mxu0 0.0
    %320 = vmatpush1.msra.mxu0 %v81
    %321 = vmatprep.subr.mxu0 0.0
    %322 = vmatpush1.msra.mxu0 %v82
    %323 = vmatprep.subr.mxu0 0.0
    %324 = vmatpush1.msra.mxu0 %v83
    %325 = vmatprep.subr.mxu0 0.0
    %326 = vmatpush1.msra.mxu0 %v84
    %327 = vmatprep.subr.mxu0 0.0
    %328 = vmatpush1.msra.mxu0 %v85
    %329 = vmatprep.subr.mxu0 0.0
    %330 = vmatpush1.msra.mxu0 %v86
    %331 = vmatprep.subr.mxu0 0.0
    %332 = vmatpush1.msra.mxu0 %v87
    %333 = vmatprep.subr.mxu0 0.0
    %334 = vmatpush1.msra.mxu0 %v88
    %335 = vmatprep.subr.mxu0 0.0
    %336 = vmatpush1.msra.mxu0 %v89
    %337 = vmatprep.subr.mxu0 0.0
    %338 = vmatpush1.msra.mxu0 %v90
    %339 = vmatprep.subr.mxu0 0.0
    %340 = vmatpush1.msra.mxu0 %v91
    %341 = vmatprep.subr.mxu0 0.0
    %342 = vmatpush1.msra.mxu0 %v92
    %343 = vmatprep.subr.mxu0 0.0
    %344 = vmatpush1.msra.mxu0 %v93
    %345 = vmatprep.subr.mxu0 0.0
    %346 = vmatpush1.msra.mxu0 %v94
    %347 = vmatprep.subr.mxu0 0.0
    %348 = vmatpush1.msra.mxu0 0.0
    %349 = vmatprep.subr.mxu0 0.0
    %350 = vmatpush1.msra.mxu0 0.0
    %351 = vmatprep.subr.mxu0 0.0
    %352 = vmatpush1.msra.mxu0 0.0
    %353 = vmatprep.subr.mxu0 0.0
    %354 = vmatpush1.msra.mxu0 0.0
    %355 = vmatprep.subr.mxu0 0.0
    %356 = vmatpush1.msra.mxu0 0.0
    %357 = vmatprep.subr.mxu0 0.0
    %358 = vmatpush1.msra.mxu0 0.0
    %359 = vmatprep.subr.mxu0 0.0
    %360 = vmatpush1.msra.mxu0 0.0
    %361 = vmatprep.subr.mxu0 0.0
    %362 = vmatpush1.msra.mxu0 0.0
    %363 = vmatprep.subr.mxu0 0.0
    %364 = vmatpush1.msra.mxu0 0.0
    %365 = vmatprep.subr.mxu0 0.0
    %366 = vmatpush1.msra.mxu0 0.0
    %367 = vmatprep.subr.mxu0 0.0
    %368 = vmatpush1.msra.mxu0 0.0
    %369 = vmatprep.subr.mxu0 0.0
    %370 = vmatpush1.msra.mxu0 0.0
    %371 = vmatprep.subr.mxu0 0.0
    %372 = vmatpush1.msra.mxu0 0.0
    %373 = vmatprep.subr.mxu0 0.0
    %374 = vmatpush1.msra.mxu0 0.0
    %375 = vmatprep.subr.mxu0 0.0
    %376 = vmatpush1.msra.mxu0 0.0
    %377 = vmatprep.subr.mxu0 0.0
    %378 = vmatpush1.msra.mxu0 0.0
    %379 = vmatprep.mubr.f32.mxu0 0.0
    %380 = vmatmul.mubr.f32.gmra.mrb[0].mxu0 %v310
    %v381 = vpop.f32.mrb[0].mxu0
    %v382 = vadd.f32 %v314, %v381
    %v383 = vpop.f32.mrb[0].mxu0
    %384 = vdwg.mxu0
    %v385 = vlaneseq
    %v386 = vshrl.u32 %v385, 7
    %v387 = vsub.s32 0, %v386
    %v388 = vrot.slane %v46, %v387
    %v389 = vadd.f32 %v382, %v388
    %390 = vmax.xlane.f32.xlu0 %v389
    %v391 = vpop.xlane.xlu0 %390
    %v392 = vsub.f32 %v389, %v391
    %v393 = vmul.f32 %v392, 1.442695
    %v394 = vpow.pop %v393
    %395 = vadd.xlane.f32.xlu0 %v394
    %v396 = vpop.xlane.xlu0 %395
    %v397 = vrcp.pop %v396
    %v398 = vmul.f32 %v394, %v397
    %399 = vst [vmem:[#allocation7] sm:$0xff] %v398
    // Predicated region
    $region18: #{tpu_custom_call.1} parent=1 // pred_check
      _
    $region19: #{tpu_custom_call.1} parent=1 // pred_check_branch
      %401 = sbr.rel (0) target = $region21
    $region20: #{tpu_custom_call.1} parent=1 // pred_region
      %s403 = ssub.s32 128, 128
      %404 = vsyncadd [#allocation4], %s403
      %s406 = sshll.u32 [#allocation7], 4
      %s407 = int_to_ptr.vmem [resolvable:$true] %s406
      %409 = dma.vmem_to_hbm [thread:$0]  %s407, 128, %s2, [#allocation4]
    $region21: #{tpu_custom_call.1} parent=1 // pred_fallthru
      _
    // Predicated region
    $region22: #{tpu_custom_call.1} parent=1 // pred_check
      _
    $region23: #{tpu_custom_call.1} parent=1 // pred_check_branch
      %411 = sbr.rel (0) target = $region25
    $region24: #{tpu_custom_call.1} parent=1 // pred_region
      %412 = dma.done [#allocation4], 128
    $region25: #{tpu_custom_call.1} parent=1 // pred_fallthru
      _
    %413 = vsyncpa [#allocation3], 1
    %414 = vsyncpa [#allocation6], 1
    %415 = vsyncpa [#allocation4], 1

</llo_original>
